<compile_context>
chip_gen: v7x
topology: tpu7x:2x2x1
jax: 0.10.0
libtpu: 0.0.40
codegen_flags: <defaults>
</compile_context>

<pallas_src>
import functools

import jax
import jax.numpy as jnp
from jax.experimental import pallas as pl
from jax.experimental.pallas import tpu as pltpu


def _round_up(x, m):
    return ((x + m - 1) // m) * m


def _ensamble_kernel(x_ref, w_ref, b_ref, o_ref, acc_ref, *, pc_real):
    # x_ref: (TM, TK) bf16      w_ref: (TK, PC_pad) bf16
    # b_ref: (1, PC_pad) f32    o_ref: (TM, PC_pad) f32
    # acc_ref: (TM, PC_pad) f32 scratch, resident across the K grid axis.
    k = pl.program_id(1)

    @pl.when(k == 0)
    def _():
        acc_ref[...] = jnp.zeros_like(acc_ref)

    # bf16 x bf16 -> f32 accumulation on the MXU; no explicit f32 upcast.
    acc_ref[...] += jnp.dot(x_ref[...], w_ref[...],
                            preferred_element_type=jnp.float32)

    @pl.when(k == pl.num_programs(1) - 1)
    def _():
        logits = acc_ref[...] + b_ref[...]                      # (TM, PC_pad)
        # log-softmax over dim=1, restricted to the real PC lanes (padded
        # zero-columns are excluded from both the max and the logsumexp).
        lane = jax.lax.broadcasted_iota(jnp.int32, logits.shape, 1)
        valid = lane < pc_real
        m = jnp.max(jnp.where(valid, logits, -jnp.inf), axis=-1, keepdims=True)
        shifted = logits - m
        denom = jnp.sum(jnp.where(valid, jnp.exp(shifted), 0.0),
                        axis=-1, keepdims=True)
        o_ref[...] = (shifted - jnp.log(denom)).astype(o_ref.dtype)


def new_ensamble42_forward(images, w_all, b_all, *, compute_dtype=jnp.bfloat16):
    """Fused concat(preprocessor(images), dim=1) + log_softmax(dim=1).

    images: (B, C, H, W); w_all: (D, PC) column-stacked preprocessor weights;
    b_all: (PC,) stacked biases, with D = C*H*W and PC = num_pre * classes.
    """
    B = images.shape[0]
    D = images.shape[1] * images.shape[2] * images.shape[3]
    PC = w_all.shape[1]

    # --- tile sizes ---------------------------------------------------------
    TM = min(256, _round_up(B, 8))       # batch tile (multiple of 8 sublanes)
    TK = min(512, _round_up(D, 128))     # reduction (D) tile, multiple of 128
    PC_pad = _round_up(PC, 128)          # lane-dense output width
    D_pad = _round_up(D, TK)

    nb = pl.cdiv(B, TM)
    nk = D_pad // TK

    # --- glue (plain JAX): flatten NCHW, zero-pad, cast to bf16 -------------
    x = images.reshape(B, D).astype(compute_dtype)
    if D_pad != D:
        x = jnp.pad(x, ((0, 0), (0, D_pad - D)))
    w = w_all.astype(compute_dtype)
    if D_pad != D or PC_pad != PC:
        w = jnp.pad(w, ((0, D_pad - D), (0, PC_pad - PC)))
    b2 = jnp.pad(b_all.astype(jnp.float32), (0, PC_pad - PC)).reshape(1, PC_pad)

    bytes_accessed = (x.size * x.dtype.itemsize
                      + w.size * w.dtype.itemsize
                      + b2.size * 4
                      + B * PC_pad * 4)
    cost = pl.CostEstimate(flops=2 * B * D_pad * PC_pad,
                           transcendentals=B * PC_pad,
                           bytes_accessed=bytes_accessed)

    out = pl.pallas_call(
        functools.partial(_ensamble_kernel, pc_real=PC),
        out_shape=jax.ShapeDtypeStruct((B, PC_pad), jnp.float32),
        grid_spec=pltpu.PrefetchScalarGridSpec(
            num_scalar_prefetch=0,
            grid=(nb, nk),
            in_specs=[
                pl.BlockSpec((TM, TK), lambda i, k: (i, k)),       # x tile
                pl.BlockSpec((TK, PC_pad), lambda i, k: (k, 0)),   # W tile
                pl.BlockSpec((1, PC_pad), lambda i, k: (0, 0)),    # bias
            ],
            out_specs=pl.BlockSpec((TM, PC_pad), lambda i, k: (i, 0)),
            scratch_shapes=[pltpu.VMEM((TM, PC_pad), jnp.float32)],
        ),
        compiler_params=pltpu.CompilerParams(
            dimension_semantics=("parallel", "arbitrary"),
            vmem_limit_bytes=32 * 1024 * 1024,
        ),
        cost_estimate=cost,
    )(x, w, b2)

    # Drop the lane padding; log-softmax was computed over the real PC lanes.
    return out[:, :PC]


if __name__ == "__main__":
    # Module-consistent small shapes: numChannels=12, classes=10,
    # 3 synthetic preprocessors, 16x16 spatial, batch=2.
    B, C, H, W = 2, 12, 16, 16
    classes = 10
    num_pre = 3
    D = C * H * W
    PC = num_pre * classes

    key = jax.random.PRNGKey(0)
    k_img, k_w, k_b = jax.random.split(key, 3)

    images = jax.random.normal(k_img, (B, C, H, W), dtype=jnp.float32)
    # Stacked preprocessor weights (D, num_pre*classes) and biases.
    w_all = jax.random.normal(k_w, (D, PC), dtype=jnp.float32) * 0.02
    b_all = jax.random.normal(k_b, (PC,), dtype=jnp.float32) * 0.01

    out = jax.block_until_ready(new_ensamble42_forward(images, w_all, b_all))

    # sanity 1: shape + rows of log-softmax exp-sum to 1
    assert out.shape == (B, PC)
    row_sums = jnp.sum(jnp.exp(out), axis=1)
    assert bool(jnp.all(jnp.abs(row_sums - 1.0) < 1e-4))

    # sanity 2: matches a plain-JAX reference (same bf16 inputs, f32 accum)
    xr = images.reshape(B, D).astype(jnp.bfloat16)
    wr = w_all.astype(jnp.bfloat16)
    ref = jax.nn.log_softmax(
        jnp.dot(xr, wr, preferred_element_type=jnp.float32) + b_all, axis=1)
    assert bool(jnp.max(jnp.abs(out - ref)) < 1e-2)

    print("KERNEL_OK")
</pallas_src>

<mosaic_0001>
module attributes {stable_mosaic.version = 11 : i64} {
  func.func @_ensamble_kernel(%arg0: i32, %arg1: i32, %arg2: memref<8x512xbf16, #tpu.memory_space<vmem>>, %arg3: memref<512x128xbf16, #tpu.memory_space<vmem>>, %arg4: memref<1x128xf32, #tpu.memory_space<vmem>>, %arg5: memref<8x128xf32, #tpu.memory_space<vmem>>, %arg6: memref<8x128xf32, #tpu.memory_space<vmem>>) attributes {dimension_semantics = [#tpu.dimension_semantics<parallel>, #tpu.dimension_semantics<arbitrary>], iteration_bounds = array<i64: 1, 6>, scalar_prefetch = 0 : i64, scratch_operands = 1 : i64, tpu.core_type = #tpu.core_type<tc>, window_params = [{transform_indices = @transform_0, window_bounds = array<i64: 8, 512>}, {transform_indices = @transform_1, window_bounds = array<i64: 512, 128>}, {pipeline_mode = #tpu.pipeline_mode<synchronous>, transform_indices = @transform_2, window_bounds = array<i64: 1, 128>}, {transform_indices = @transform_3, window_bounds = array<i64: 8, 128>}]} {
    %c0_i32 = arith.constant 0 : i32
    %0 = arith.cmpi eq, %arg1, %c0_i32 : i32
    %1 = arith.extui %0 : i1 to i32
    %c0_i32_0 = arith.constant 0 : i32
    %2 = arith.cmpi ne, %1, %c0_i32_0 : i32
    scf.if %2 {
      %cst_9 = arith.constant 0.000000e+00 : f32
      %12 = vector.broadcast %cst_9 : f32 to vector<8x128xf32>
      %c0_10 = arith.constant 0 : index
      %c0_11 = arith.constant 0 : index
      %13 = vector.load %arg6[%c0_10, %c0_11] : memref<8x128xf32, #tpu.memory_space<vmem>>, vector<8x128xf32>
      tpu.vector_store %arg6[%c0_10, %c0_11], %12 {strides = array<i32>} : memref<8x128xf32, #tpu.memory_space<vmem>>, vector<8x128xf32>,
    } else {
    }
    %c0 = arith.constant 0 : index
    %c0_1 = arith.constant 0 : index
    %3 = vector.load %arg6[%c0, %c0_1] : memref<8x128xf32, #tpu.memory_space<vmem>>, vector<8x128xf32>
    %c0_2 = arith.constant 0 : index
    %c0_3 = arith.constant 0 : index
    %4 = vector.load %arg2[%c0_2, %c0_3] : memref<8x512xbf16, #tpu.memory_space<vmem>>, vector<8x512xbf16>
    %c0_4 = arith.constant 0 : index
    %c0_5 = arith.constant 0 : index
    %5 = vector.load %arg3[%c0_4, %c0_5] : memref<512x128xbf16, #tpu.memory_space<vmem>>, vector<512x128xbf16>
    %cst = arith.constant dense<0.000000e+00> : vector<8x128xf32>
    %6 = tpu.matmul %4, %5, %cst {dimension_numbers = #tpu.dot_dimension_numbers<[1], [0], [0], [1], [0, 0, 1, 1], [], []>} : vector<8x512xbf16>, vector<512x128xbf16>, vector<8x128xf32> -> vector<8x128xf32>
    %7 = arith.addf %3, %6 : vector<8x128xf32>
    %c0_6 = arith.constant 0 : index
    %c0_7 = arith.constant 0 : index
    %8 = vector.load %arg6[%c0_6, %c0_7] : memref<8x128xf32, #tpu.memory_space<vmem>>, vector<8x128xf32>
    tpu.vector_store %arg6[%c0_6, %c0_7], %7 {strides = array<i32>} : memref<8x128xf32, #tpu.memory_space<vmem>>, vector<8x128xf32>,
    %c5_i32 = arith.constant 5 : i32
    %9 = arith.cmpi eq, %arg1, %c5_i32 : i32
    %10 = arith.extui %9 : i1 to i32
    %c0_i32_8 = arith.constant 0 : i32
    %11 = arith.cmpi ne, %10, %c0_i32_8 : i32
    scf.if %11 {
      %c0_9 = arith.constant 0 : index
      %c0_10 = arith.constant 0 : index
      %12 = vector.load %arg6[%c0_9, %c0_10] : memref<8x128xf32, #tpu.memory_space<vmem>>, vector<8x128xf32>
      %c0_11 = arith.constant 0 : index
      %c0_12 = arith.constant 0 : index
      %13 = vector.load %arg4[%c0_11, %c0_12] : memref<1x128xf32, #tpu.memory_space<vmem>>, vector<1x128xf32>
      %14 = vector.broadcast %13 : vector<1x128xf32> to vector<8x128xf32>
      %15 = arith.addf %12, %14 : vector<8x128xf32>
      %16 = tpu.iota {dimensions = array<i32: 1>} : vector<8x128xi32>
      %c30_i32 = arith.constant 30 : i32
      %17 = vector.broadcast %c30_i32 : i32 to vector<8x128xi32>
      %18 = arith.cmpi slt, %16, %17 : vector<8x128xi32>
      %cst_13 = arith.constant 0xFF800000 : f32
      %19 = vector.broadcast %cst_13 : f32 to vector<8x128xf32>
      %20 = arith.select %18, %15, %19 : vector<8x128xi1>, vector<8x128xf32>
      %cst_14 = arith.constant dense<0xFF800000> : vector<8xf32>
      %21 = vector.multi_reduction <maximumf>, %20, %cst_14 [1] : vector<8x128xf32> to vector<8xf32>
      %22 = vector.shape_cast %21 : vector<8xf32> to vector<8x1xf32>
      %23 = vector.broadcast %22 : vector<8x1xf32> to vector<8x128xf32>
      %24 = arith.subf %15, %23 : vector<8x128xf32>
      %25 = math.exp %24 : vector<8x128xf32>
      %cst_15 = arith.constant 0.000000e+00 : f32
      %26 = vector.broadcast %cst_15 : f32 to vector<8x128xf32>
      %27 = arith.select %18, %25, %26 : vector<8x128xi1>, vector<8x128xf32>
      %cst_16 = arith.constant dense<0.000000e+00> : vector<8xf32>
      %28 = vector.multi_reduction <add>, %27, %cst_16 [1] : vector<8x128xf32> to vector<8xf32>
      %29 = vector.shape_cast %28 : vector<8xf32> to vector<8x1xf32>
      %30 = math.log %29 : vector<8x1xf32>
      %31 = vector.broadcast %30 : vector<8x1xf32> to vector<8x128xf32>
      %32 = arith.subf %24, %31 : vector<8x128xf32>
      %c0_17 = arith.constant 0 : index
      %c0_18 = arith.constant 0 : index
      %33 = vector.load %arg5[%c0_17, %c0_18] : memref<8x128xf32, #tpu.memory_space<vmem>>, vector<8x128xf32>
      tpu.vector_store %arg5[%c0_17, %c0_18], %32 {strides = array<i32>} : memref<8x128xf32, #tpu.memory_space<vmem>>, vector<8x128xf32>,
    } else {
    }
    return
  }
  func.func @transform_0(%arg0: i32, %arg1: i32) -> (i32, i32) {
    %c0_i32 = arith.constant 0 : i32
    return %arg0, %arg1 : i32, i32
  }
  func.func @transform_1(%arg0: i32, %arg1: i32) -> (i32, i32) {
    %c0_i32 = arith.constant 0 : i32
    %c0_i32_0 = arith.constant 0 : i32
    return %arg1, %c0_i32 : i32, i32
  }
  func.func @transform_2(%arg0: i32, %arg1: i32) -> (i32, i32) {
    %c0_i32 = arith.constant 0 : i32
    %c0_i32_0 = arith.constant 0 : i32
    %c0_i32_1 = arith.constant 0 : i32
    return %c0_i32, %c0_i32_0 : i32, i32
  }
  func.func @transform_3(%arg0: i32, %arg1: i32) -> (i32, i32) {
    %c0_i32 = arith.constant 0 : i32
    %c0_i32_0 = arith.constant 0 : i32
    return %arg0, %c0_i32 : i32, i32
  }
}

</mosaic_0001>

<llo_original>
// kernel: tpu_custom_call.1
$region0: #{tpu_custom_call.1}
  #allocation0 [shape = 'u32[]', space=smem, size = 0x4, offset = 0x4, fixed_abs, tag = 'smem constant byte address 0x4 - core index']
  #allocation1 [shape = 'u32[144,128]{1,0:T(1,128)}', space=vmem, size = 0x12000, scoped, tag = 'internal scratch']
  #allocation2 [shape = 'f32[8,128]{1,0:T(8,128)}', space=vmem, size = 0x1000, scoped, tag = 'scratch operand']
  %s0 = inlined_call_operand.hbm [shape: bf16[2,3072], index: 0, kind: input, shape index: {}]
  %s1 = inlined_call_operand.hbm [shape: bf16[3072,128], index: 1, kind: input, shape index: {}]
  %s2 = inlined_call_operand.vmem [shape: f32[1,128], index: 2, kind: input, shape index: {}]
  %s3 = inlined_call_operand.hbm [shape: f32[2,128], index: 3, kind: output, shape index: {}]
  %s4 = sld [smem:[#allocation0]]
  $region61: #{tpu_custom_call.1} parent=0
    _
  %s6 = ssub.s32 1, %s4
  %s7 = scalar_select 0, %s6, %s4
  $region1: #{tpu_custom_call.1} parent=0
    #allocation3 [shape = 'u8[16384]{0}', space=vmem, size = 0x4000, scoped, tag = 'input window, operand 0']
    #allocation4 [shape = 's32[2]{0}', space=sflag, size = 0x8, scoped, tag = 'scoped memory for tpu_custom_call.1']
    #allocation5 [shape = 's32[2]{0}', space=sflag, size = 0x8, scoped, tag = 'scoped memory for tpu_custom_call.1']
    #allocation6 [shape = 'u8[262144]{0}', space=vmem, size = 0x40000, scoped, tag = 'input window, operand 1']
    #allocation7 [shape = 's32[2]{0}', space=sflag, size = 0x8, scoped, tag = 'scoped memory for tpu_custom_call.1']
    #allocation8 [shape = 'u8[4096]{0}', space=vmem, size = 0x1000, scoped, tag = 'output window, operand 0, single buffered']
    %8 = vsyncpa [#allocation4], 0
    %s9 = scalar_lea.sflag [#allocation4], 1
    %10 = vsyncpa %s9, 0
    %11 = vsyncpa [#allocation7], 0
    %s12 = scalar_lea.sflag [#allocation7], 1
    %13 = vsyncpa %s12, 0
    %14 = vsyncpa [#allocation5], 0
    loop: start=0, step=1, limit=8
    $region2: #{tpu_custom_call.1} parent=1 // loop_pre_header
      _
    $region3: #{tpu_custom_call.1} parent=1 // loop_header
      %s16 = sphi 0, %s20
      %p17 = scmp.ge.s32.totalorder %s16, 8
      %s23 = sphi 0, %s35
      %s24 = sphi 0, %s31
      %s25 = sphi 0, %s23
      %s26 = sphi 0, %s24
      %s27 = sphi 0, %s25
      %s28 = sphi 0, %s26
      %s40 = sphi 0, %s42
      %s43 = sphi 0, %s40
      %s44 = sphi 0, %s43
      %s60 = sphi 0, %s44
      %s66 = sphi 0, %s68
      %s69 = sphi 0, %s66
      %s70 = sphi 0, %s69
      %s86 = sphi 0, %s70
      %s90 = sphi 0, %s90
      %s92 = sphi 0, %s90
      %s93 = sphi 0, %s92
      %s107 = sphi 0, %s93
      %s113 = sphi 0, %s115
      %s116 = sphi 0, %s113
      %s117 = sphi 0, %s116
      %s133 = sphi 0, %s117
    $region4: #{tpu_custom_call.1} parent=1 // loop_header_branch
      %19 = sbr.rel (%p17) target = $region8
    $region5: #{tpu_custom_call.1} parent=1 // loop_body
      %s21 = ssub.s32 %s16, 1
      %s22 = ssub.s32 %s16, 2
      %s29 = sadd.s32 1, %s24
      %p30 = scmp.ge.s32.totalorder %s29, 6
      %s31 = scalar_select %p30, 0, %s29
      %s32 = sadd.s32 1, %s23
      %s33 = scalar_select %p30, %s32, %s23
      %p34 = scmp.ge.s32.totalorder %s33, 1
      %s35 = scalar_select %p34, 0, %s33
      %s36 = ssub.s32 %s23, %s35
      %s37 = ssub.s32 %s24, %s31
      %s38 = sor.u32 %s36, %s37
      %p39 = scmp.eq.s32.totalorder %s38, 0
      %s41 = sadd.s32 %s40, 1
      %s42 = scalar_select %p39, %s40, %s41
      %p45 = pneg %p39
      %p46 = scmp.eq.s32.totalorder %s16, 5
      %p47 = por %p45, %p46
      %p48 = scmp.ne.s32.totalorder %s40, %s43
      %p49 = scmp.eq.s32.totalorder %s16, 0
      %p50 = por %p48, %p49
      %p51 = scmp.ne.s32.totalorder %s40, %s43
      %p52 = scmp.eq.s32.totalorder %s21, 5
      %p53 = por %p51, %p52
      %p54 = scmp.ne.s32.totalorder %s43, %s44
      %p55 = scmp.eq.s32.totalorder %s21, 0
      %p56 = por %p54, %p55
      %p57 = scmp.ne.s32.totalorder %s43, %s44
      %p58 = scmp.eq.s32.totalorder %s22, 5
      %p59 = por %p57, %p58
      %p61 = scmp.ne.s32.totalorder %s44, %s60
      %p62 = scmp.eq.s32.totalorder %s22, 0
      %p63 = por %p61, %p62
      %s64 = ssub.s32 %s24, %s31
      %p65 = scmp.eq.s32.totalorder %s64, 0
      %s67 = sadd.s32 %s66, 1
      %s68 = scalar_select %p65, %s66, %s67
      %p71 = pneg %p65
      %p72 = scmp.eq.s32.totalorder %s16, 5
      %p73 = por %p71, %p72
      %p74 = scmp.ne.s32.totalorder %s66, %s69
      %p75 = scmp.eq.s32.totalorder %s16, 0
      %p76 = por %p74, %p75
      %p77 = scmp.ne.s32.totalorder %s66, %s69
      %p78 = scmp.eq.s32.totalorder %s21, 5
      %p79 = por %p77, %p78
      %p80 = scmp.ne.s32.totalorder %s69, %s70
      %p81 = scmp.eq.s32.totalorder %s21, 0
      %p82 = por %p80, %p81
      %p83 = scmp.ne.s32.totalorder %s69, %s70
      %p84 = scmp.eq.s32.totalorder %s22, 5
      %p85 = por %p83, %p84
      %p87 = scmp.ne.s32.totalorder %s70, %s86
      %p88 = scmp.eq.s32.totalorder %s22, 0
      %p89 = por %p87, %p88
      %s91 = sadd.s32 %s90, 1
      %p94 = scmp.eq.s32.totalorder %s16, 5
      %p95 = scmp.ne.s32.totalorder %s90, %s92
      %p96 = scmp.eq.s32.totalorder %s16, 0
      %p97 = por %p95, %p96
      %p98 = scmp.ne.s32.totalorder %s90, %s92
      %p99 = scmp.eq.s32.totalorder %s21, 5
      %p100 = por %p98, %p99
      %p101 = scmp.ne.s32.totalorder %s92, %s93
      %p102 = scmp.eq.s32.totalorder %s21, 0
      %p103 = por %p101, %p102
      %p104 = scmp.ne.s32.totalorder %s92, %s93
      %p105 = scmp.eq.s32.totalorder %s22, 5
      %p106 = por %p104, %p105
      %p108 = scmp.ne.s32.totalorder %s93, %s107
      %p109 = scmp.eq.s32.totalorder %s22, 0
      %p110 = por %p108, %p109
      %s111 = ssub.s32 %s23, %s35
      %p112 = scmp.eq.s32.totalorder %s111, 0
      %s114 = sadd.s32 %s113, 1
      %s115 = scalar_select %p112, %s113, %s114
      %p118 = pneg %p112
      %p119 = scmp.eq.s32.totalorder %s16, 5
      %p120 = por %p118, %p119
      %p121 = scmp.ne.s32.totalorder %s113, %s116
      %p122 = scmp.eq.s32.totalorder %s16, 0
      %p123 = por %p121, %p122
      %p124 = scmp.ne.s32.totalorder %s113, %s116
      %p125 = scmp.eq.s32.totalorder %s21, 5
      %p126 = por %p124, %p125
      %p127 = scmp.ne.s32.totalorder %s116, %s117
      %p128 = scmp.eq.s32.totalorder %s21, 0
      %p129 = por %p127, %p128
      %p130 = scmp.ne.s32.totalorder %s116, %s117
      %p131 = scmp.eq.s32.totalorder %s22, 5
      %p132 = por %p130, %p131
      %p134 = scmp.ne.s32.totalorder %s117, %s133
      %p135 = scmp.eq.s32.totalorder %s22, 0
      %p136 = por %p134, %p135
      %p137 = scmp.le.s32.totalorder 1, %s16
      %p138 = scmp.lt.s32.totalorder %s16, 7
      %p139 = pnand %p137, %p138
      %p140 = pneg %p139
      // Predicated region
      $region9: #{tpu_custom_call.1} parent=5 // pred_check
        _
      $region10: #{tpu_custom_call.1} parent=5 // pred_check_branch
        %142 = sbr.rel (%p139) target = $region12
      $region11: #{tpu_custom_call.1} parent=5 // pred_region
        %s143 = ssub.s32 %s16, 1
        // Predicated region
        $region13: #{tpu_custom_call.1} parent=11 // pred_check
          %p144 = pneg %p103
        $region14: #{tpu_custom_call.1} parent=11 // pred_check_branch
          %146 = sbr.rel (%p144) target = $region16
        $region15: #{tpu_custom_call.1} parent=11 // pred_region
          _
        $region16: #{tpu_custom_call.1} parent=11 // pred_fallthru
          _
      $region12: #{tpu_custom_call.1} parent=5 // pred_fallthru
        _
      %p147 = scmp.lt.s32.totalorder %s16, 6
      // Predicated region
      $region17: #{tpu_custom_call.1} parent=5 // pred_check
        %p148 = pneg %p147
      $region18: #{tpu_custom_call.1} parent=5 // pred_check_branch
        %150 = sbr.rel (%p148) target = $region20
      $region19: #{tpu_custom_call.1} parent=5 // pred_region
        // Predicated region
        $region21: #{tpu_custom_call.1} parent=19 // pred_check
          %p151 = pneg %p50
        $region22: #{tpu_custom_call.1} parent=19 // pred_check_branch
          %153 = sbr.rel (%p151) target = $region24
        $region23: #{tpu_custom_call.1} parent=19 // pred_region
          %s154 = sand.u32 %s40, 1
          %s155 = scalar_lea.sflag [#allocation4], %s154
          %s156 = sand.u32 %s40, 1
          %s157 = smul.addr %s156, 16
          %s158 = scalar_lea.vmem [#allocation3], %s157
          %s159 = smul.u32 4, %s23
          %s160 = smul.u32 4, %s24
          %s161 = ssub.s32 1, %s159
          %s162 = smul.u32 16, %s161
          %s163 = smul.u32 %s162, 4
          %s165 = ssub.s32 256, %s163
          %166 = vsyncadd %s155, %s165
          %p167 = scmp.ne.s32.totalorder 0, %s163
          %s168 = smul.addr %s159, 24
          %s169 = sadd.s32 %s160, %s168
          %s170 = smul.addr %s169, 16
          %s171 = scalar_lea.hbm %s0, %s170
          %s172 = smul.u32 4, %s161
          %s173 = sshll.u32 %s158, 4
          %s174 = int_to_ptr.vmem [resolvable:$true] %s173
          %s175 = sshll.u32 %s172, 4
          %179 = dma.hbm_to_vmem [thread:$0]  (%p167), %s171, %s175, %s174, %s155, 384, 64, 4
        $region24: #{tpu_custom_call.1} parent=19 // pred_fallthru
          _
        // Predicated region
        $region25: #{tpu_custom_call.1} parent=19 // pred_check
          %p180 = pneg %p76
        $region26: #{tpu_custom_call.1} parent=19 // pred_check_branch
          %182 = sbr.rel (%p180) target = $region28
        $region27: #{tpu_custom_call.1} parent=19 // pred_region
          %s183 = sand.u32 %s66, 1
          %s184 = scalar_lea.sflag [#allocation7], %s183
          %s185 = sand.u32 %s66, 1
          %s186 = smul.addr %s185, 256
          %s187 = scalar_lea.vmem [#allocation6], %s186
          %s188 = smul.u32 64, %s24
          %s190 = ssub.s32 4096, 4096
          %191 = vsyncadd %s184, %s190
          %s192 = smul.addr %s188, 64
          %s193 = scalar_lea.hbm %s1, %s192
          %s194 = sshll.u32 %s187, 4
          %s195 = int_to_ptr.vmem [resolvable:$true] %s194
          %200 = dma.hbm_to_vmem [thread:$0]  %s193, 4096, %s195, %s184, 64, 64, 4
        $region28: #{tpu_custom_call.1} parent=19 // pred_fallthru
          _
      $region20: #{tpu_custom_call.1} parent=5 // pred_fallthru
        _
      %p201 = scmp.le.s32.totalorder 1, %s16
      %p202 = scmp.lt.s32.totalorder %s16, 7
      %p203 = pnand %p201, %p202
      %p204 = pneg %p203
      // Predicated region
      $region29: #{tpu_custom_call.1} parent=5 // pred_check
        _
      $region30: #{tpu_custom_call.1} parent=5 // pred_check_branch
        %206 = sbr.rel (%p203) target = $region32
      $region31: #{tpu_custom_call.1} parent=5 // pred_region
        %s207 = ssub.s32 %s16, 1
        %s208 = sand.u32 %s43, 1
        %s209 = scalar_lea.sflag [#allocation4], %s208
        %s210 = sand.u32 %s43, 1
        %s211 = smul.addr %s210, 16
        %s212 = scalar_lea.vmem [#allocation3], %s211
        // Predicated region
        $region33: #{tpu_custom_call.1} parent=31 // pred_check
          %p213 = pneg %p56
        $region34: #{tpu_custom_call.1} parent=31 // pred_check_branch
          %215 = sbr.rel (%p213) target = $region36
        $region35: #{tpu_custom_call.1} parent=31 // pred_region
          %216 = dma.done %s209, 256
        $region36: #{tpu_custom_call.1} parent=31 // pred_fallthru
          _
        %s217 = sand.u32 %s69, 1
        %s218 = scalar_lea.sflag [#allocation7], %s217
        %s219 = sand.u32 %s69, 1
        %s220 = smul.addr %s219, 256
        %s221 = scalar_lea.vmem [#allocation6], %s220
        // Predicated region
        $region37: #{tpu_custom_call.1} parent=31 // pred_check
          %p222 = pneg %p82
        $region38: #{tpu_custom_call.1} parent=31 // pred_check_branch
          %224 = sbr.rel (%p222) target = $region40
        $region39: #{tpu_custom_call.1} parent=31 // pred_region
          %225 = dma.done %s218, 4096
        $region40: #{tpu_custom_call.1} parent=31 // pred_fallthru
          _
        %s226 = sand.u32 %s43, 1
        %s227 = scalar_lea.sflag [#allocation4], %s226
        %s228 = sand.u32 %s43, 1
        %s229 = smul.addr %s228, 16
        %s230 = scalar_lea.vmem [#allocation3], %s229
        %p231 = pneg %p56
        %p232 = pneg %p53
        %s233 = sand.u32 %s69, 1
        %s234 = scalar_lea.sflag [#allocation7], %s233
        %s235 = sand.u32 %s69, 1
        %s236 = smul.addr %s235, 256
        %s237 = scalar_lea.vmem [#allocation6], %s236
        %p238 = pneg %p82
        %p239 = pneg %p79
        %p240 = pneg %p103
        %p241 = pneg %p100
        %p242 = pneg %p129
        %p243 = pneg %p126
        %s244 = smul.u32 4, %s25
        %s245 = smul.u32 4, %s26
        %s246 = ssub.s32 1, %s244
        %s247 = smul.u32 16, %s246
        %s248 = smul.u32 %s247, 4
        %s249 = smul.u32 64, %s26
        %s250 = smul.u32 4, %s25
        %s251 = ssub.s32 1, %s250
        %s252 = smul.u32 32, %s251
        %p254 = scmp.eq.s32.totalorder %s26, 0
        // Predicated region
        $region41: #{tpu_custom_call.1} parent=31 // pred_check
          %p255 = pneg %p254
        $region42: #{tpu_custom_call.1} parent=31 // pred_check_branch
          %257 = sbr.rel (%p255) target = $region44
        $region43: #{tpu_custom_call.1} parent=31 // pred_region
          %258 = vst [vmem:[#allocation2] sm:$0xff] 0.0
        $region44: #{tpu_custom_call.1} parent=31 // pred_fallthru
          _
        %v259 = vld [vmem:[#allocation2] sm:$0xff]
        %v260 = vld [vmem:[%s212] sm:$0xf]
        %v261 = vld [vmem:[%s212 + $0x4] sm:$0xf]
        %v262 = vld [vmem:[%s212 + $0x8] sm:$0xf]
        %v263 = vld [vmem:[%s212 + $0xc] sm:$0xf]
        %v264 = vld [vmem:[%s221] sm:$0xf]
        %v265 = vld [vmem:[%s221 + $0x4] sm:$0xf]
        %v266 = vld [vmem:[%s221 + $0x8] sm:$0xf]
        %v267 = vld [vmem:[%s221 + $0xc] sm:$0xf]
        %v268 = vld [vmem:[%s221 + $0x10] sm:$0xf]
        %v269 = vld [vmem:[%s221 + $0x14] sm:$0xf]
        %v270 = vld [vmem:[%s221 + $0x18] sm:$0xf]
        %v271 = vld [vmem:[%s221 + $0x1c] sm:$0xf]
        %v272 = vld [vmem:[%s221 + $0x20] sm:$0xf]
        %v273 = vld [vmem:[%s221 + $0x24] sm:$0xf]
        %v274 = vld [vmem:[%s221 + $0x28] sm:$0xf]
        %v275 = vld [vmem:[%s221 + $0x2c] sm:$0xf]
        %v276 = vld [vmem:[%s221 + $0x30] sm:$0xf]
        %v277 = vld [vmem:[%s221 + $0x34] sm:$0xf]
        %v278 = vld [vmem:[%s221 + $0x38] sm:$0xf]
        %v279 = vld [vmem:[%s221 + $0x3c] sm:$0xf]
        %v280 = vld [vmem:[%s221 + $0x40] sm:$0xf]
        %v281 = vld [vmem:[%s221 + $0x44] sm:$0xf]
        %v282 = vld [vmem:[%s221 + $0x48] sm:$0xf]
        %v283 = vld [vmem:[%s221 + $0x4c] sm:$0xf]
        %v284 = vld [vmem:[%s221 + $0x50] sm:$0xf]
        %v285 = vld [vmem:[%s221 + $0x54] sm:$0xf]
        %v286 = vld [vmem:[%s221 + $0x58] sm:$0xf]
        %v287 = vld [vmem:[%s221 + $0x5c] sm:$0xf]
        %v288 = vld [vmem:[%s221 + $0x60] sm:$0xf]
        %v289 = vld [vmem:[%s221 + $0x64] sm:$0xf]
        %v290 = vld [vmem:[%s221 + $0x68] sm:$0xf]
        %v291 = vld [vmem:[%s221 + $0x6c] sm:$0xf]
        %v292 = vld [vmem:[%s221 + $0x70] sm:$0xf]
        %v293 = vld [vmem:[%s221 + $0x74] sm:$0xf]
        %v294 = vld [vmem:[%s221 + $0x78] sm:$0xf]
        %v295 = vld [vmem:[%s221 + $0x7c] sm:$0xf]
        %v296 = vld [vmem:[%s221 + $0x80] sm:$0xf]
        %v297 = vld [vmem:[%s221 + $0x84] sm:$0xf]
        %v298 = vld [vmem:[%s221 + $0x88] sm:$0xf]
        %v299 = vld [vmem:[%s221 + $0x8c] sm:$0xf]
        %v300 = vld [vmem:[%s221 + $0x90] sm:$0xf]
        %v301 = vld [vmem:[%s221 + $0x94] sm:$0xf]
        %v302 = vld [vmem:[%s221 + $0x98] sm:$0xf]
        %v303 = vld [vmem:[%s221 + $0x9c] sm:$0xf]
        %v304 = vld [vmem:[%s221 + $0xa0] sm:$0xf]
        %v305 = vld [vmem:[%s221 + $0xa4] sm:$0xf]
        %v306 = vld [vmem:[%s221 + $0xa8] sm:$0xf]
        %v307 = vld [vmem:[%s221 + $0xac] sm:$0xf]
        %v308 = vld [vmem:[%s221 + $0xb0] sm:$0xf]
        %v309 = vld [vmem:[%s221 + $0xb4] sm:$0xf]
        %v310 = vld [vmem:[%s221 + $0xb8] sm:$0xf]
        %v311 = vld [vmem:[%s221 + $0xbc] sm:$0xf]
        %v312 = vld [vmem:[%s221 + $0xc0] sm:$0xf]
        %v313 = vld [vmem:[%s221 + $0xc4] sm:$0xf]
        %v314 = vld [vmem:[%s221 + $0xc8] sm:$0xf]
        %v315 = vld [vmem:[%s221 + $0xcc] sm:$0xf]
        %v316 = vld [vmem:[%s221 + $0xd0] sm:$0xf]
        %v317 = vld [vmem:[%s221 + $0xd4] sm:$0xf]
        %v318 = vld [vmem:[%s221 + $0xd8] sm:$0xf]
        %v319 = vld [vmem:[%s221 + $0xdc] sm:$0xf]
        %v320 = vld [vmem:[%s221 + $0xe0] sm:$0xf]
        %v321 = vld [vmem:[%s221 + $0xe4] sm:$0xf]
        %v322 = vld [vmem:[%s221 + $0xe8] sm:$0xf]
        %v323 = vld [vmem:[%s221 + $0xec] sm:$0xf]
        %v324 = vld [vmem:[%s221 + $0xf0] sm:$0xf]
        %v325 = vld [vmem:[%s221 + $0xf4] sm:$0xf]
        %v326 = vld [vmem:[%s221 + $0xf8] sm:$0xf]
        %v327 = vld [vmem:[%s221 + $0xfc] sm:$0xf]
        %v332 = vcombine.low %v260, %v261
        %v333 = vcombine.low %v262, %v263
        %v335 = vunpack.c.l.s4 1966171168
        %v336 = vunpack.c.0.s8 %v335
        %v337 = vlaneseq
        %v338 = vshrl.u32 %v337, 7
        %v339 = vsub.s32 %v336, %v338
        %v340 = vrot.slane %v332, %v339
        %v342 = vunpack.c.l.s4 1966171168
        %v343 = vunpack.c.0.s8 %v342
        %v344 = vlaneseq
        %v345 = vshrl.u32 %v344, 7
        %v346 = vsub.s32 %v343, %v345
        %v347 = vrot.slane %v333, %v346
        %v348 = vcombine.low %v340, %v347
        %v349 = vcombine.high %v340, %v347
        %v351 = vunpack.c.l.s4 1966171168
        %v352 = vunpack.c.0.s8 %v351
        %v353 = vlaneseq
        %v354 = vshrl.u32 %v353, 7
        %v355 = vsub.s32 %v352, %v354
        %v356 = vrot.slane %v348, %v355
        %v358 = vunpack.c.l.s4 1966171168
        %v359 = vunpack.c.0.s8 %v358
        %v360 = vlaneseq
        %v361 = vshrl.u32 %v360, 7
        %v362 = vsub.s32 %v359, %v361
        %v363 = vrot.slane %v349, %v362
        %v364 = vcombine.high %v356, %v356
        %v365 = vcombine.high %v363, %v363
        %v434 = vunpack.c.l.b16 %v264
        %v435 = vunpack.c.l.b16 %v265
        %v436 = vunpack.c.l.b16 %v266
        %v437 = vunpack.c.l.b16 %v267
        %v438 = vunpack.c.l.b16 %v268
        %v439 = vunpack.c.l.b16 %v269
        %v440 = vunpack.c.l.b16 %v270
        %v441 = vunpack.c.l.b16 %v271
        %v442 = vunpack.c.l.b16 %v272
        %v443 = vunpack.c.l.b16 %v273
        %v444 = vunpack.c.l.b16 %v274
        %v445 = vunpack.c.l.b16 %v275
        %v446 = vunpack.c.l.b16 %v276
        %v447 = vunpack.c.l.b16 %v277
        %v448 = vunpack.c.l.b16 %v278
        %v449 = vunpack.c.l.b16 %v279
        %v450 = vunpack.c.l.b16 %v280
        %v451 = vunpack.c.l.b16 %v281
        %v452 = vunpack.c.l.b16 %v282
        %v453 = vunpack.c.l.b16 %v283
        %v454 = vunpack.c.l.b16 %v284
        %v455 = vunpack.c.l.b16 %v285
        %v456 = vunpack.c.l.b16 %v286
        %v457 = vunpack.c.l.b16 %v287
        %v458 = vunpack.c.l.b16 %v288
        %v459 = vunpack.c.l.b16 %v289
        %v460 = vunpack.c.l.b16 %v290
        %v461 = vunpack.c.l.b16 %v291
        %v462 = vunpack.c.l.b16 %v292
        %v463 = vunpack.c.l.b16 %v293
        %v464 = vunpack.c.l.b16 %v294
        %v465 = vunpack.c.l.b16 %v295
        %v466 = vunpack.c.l.b16 %v296
        %v467 = vunpack.c.l.b16 %v297
        %v468 = vunpack.c.l.b16 %v298
        %v469 = vunpack.c.l.b16 %v299
        %v470 = vunpack.c.l.b16 %v300
        %v471 = vunpack.c.l.b16 %v301
        %v472 = vunpack.c.l.b16 %v302
        %v473 = vunpack.c.l.b16 %v303
        %v474 = vunpack.c.l.b16 %v304
        %v475 = vunpack.c.l.b16 %v305
        %v476 = vunpack.c.l.b16 %v306
        %v477 = vunpack.c.l.b16 %v307
        %v478 = vunpack.c.l.b16 %v308
        %v479 = vunpack.c.l.b16 %v309
        %v480 = vunpack.c.l.b16 %v310
        %v481 = vunpack.c.l.b16 %v311
        %v482 = vunpack.c.l.b16 %v312
        %v483 = vunpack.c.l.b16 %v313
        %v484 = vunpack.c.l.b16 %v314
        %v485 = vunpack.c.l.b16 %v315
        %v486 = vunpack.c.l.b16 %v316
        %v487 = vunpack.c.l.b16 %v317
        %v488 = vunpack.c.l.b16 %v318
        %v489 = vunpack.c.l.b16 %v319
        %v490 = vunpack.c.l.b16 %v320
        %v491 = vunpack.c.l.b16 %v321
        %v492 = vunpack.c.l.b16 %v322
        %v493 = vunpack.c.l.b16 %v323
        %v494 = vunpack.c.l.b16 %v324
        %v495 = vunpack.c.l.b16 %v325
        %v496 = vunpack.c.l.b16 %v326
        %v497 = vunpack.c.l.b16 %v327
        %v498 = vpack.c.b16 %v435, %v434
        %v499 = vpack.c.b16 %v437, %v436
        %v500 = vpack.c.b16 %v439, %v438
        %v501 = vpack.c.b16 %v441, %v440
        %v502 = vpack.c.b16 %v443, %v442
        %v503 = vpack.c.b16 %v445, %v444
        %v504 = vpack.c.b16 %v447, %v446
        %v505 = vpack.c.b16 %v449, %v448
        %v506 = vpack.c.b16 %v451, %v450
        %v507 = vpack.c.b16 %v453, %v452
        %v508 = vpack.c.b16 %v455, %v454
        %v509 = vpack.c.b16 %v457, %v456
        %v510 = vpack.c.b16 %v459, %v458
        %v511 = vpack.c.b16 %v461, %v460
        %v512 = vpack.c.b16 %v463, %v462
        %v513 = vpack.c.b16 %v465, %v464
        %v514 = vpack.c.b16 %v467, %v466
        %v515 = vpack.c.b16 %v469, %v468
        %v516 = vpack.c.b16 %v471, %v470
        %v517 = vpack.c.b16 %v473, %v472
        %v518 = vpack.c.b16 %v475, %v474
        %v519 = vpack.c.b16 %v477, %v476
        %v520 = vpack.c.b16 %v479, %v478
        %v521 = vpack.c.b16 %v481, %v480
        %v522 = vpack.c.b16 %v483, %v482
        %v523 = vpack.c.b16 %v485, %v484
        %v524 = vpack.c.b16 %v487, %v486
        %v525 = vpack.c.b16 %v489, %v488
        %v526 = vpack.c.b16 %v491, %v490
        %v527 = vpack.c.b16 %v493, %v492
        %v528 = vpack.c.b16 %v495, %v494
        %v529 = vpack.c.b16 %v497, %v496
        %562 = vmatprep.subr.bf16.mxu0 0
        %563 = vmatpush1.bf16.msra.mxu0 %v498
        %564 = vmatprep.subr.bf16.mxu0 0
        %565 = vmatpush1.bf16.msra.mxu0 %v499
        %566 = vmatprep.subr.bf16.mxu0 0
        %567 = vmatpush1.bf16.msra.mxu0 %v500
        %568 = vmatprep.subr.bf16.mxu0 0
        %569 = vmatpush1.bf16.msra.mxu0 %v501
        %570 = vmatprep.subr.bf16.mxu0 0
        %571 = vmatpush1.bf16.msra.mxu0 %v502
        %572 = vmatprep.subr.bf16.mxu0 0
        %573 = vmatpush1.bf16.msra.mxu0 %v503
        %574 = vmatprep.subr.bf16.mxu0 0
        %575 = vmatpush1.bf16.msra.mxu0 %v504
        %576 = vmatprep.subr.bf16.mxu0 0
        %577 = vmatpush1.bf16.msra.mxu0 %v505
        %578 = vmatprep.subr.bf16.mxu0 0
        %579 = vmatpush1.bf16.msra.mxu0 %v506
        %580 = vmatprep.subr.bf16.mxu0 0
        %581 = vmatpush1.bf16.msra.mxu0 %v507
        %582 = vmatprep.subr.bf16.mxu0 0
        %583 = vmatpush1.bf16.msra.mxu0 %v508
        %584 = vmatprep.subr.bf16.mxu0 0
        %585 = vmatpush1.bf16.msra.mxu0 %v509
        %586 = vmatprep.subr.bf16.mxu0 0
        %587 = vmatpush1.bf16.msra.mxu0 %v510
        %588 = vmatprep.subr.bf16.mxu0 0
        %589 = vmatpush1.bf16.msra.mxu0 %v511
        %590 = vmatprep.subr.bf16.mxu0 0
        %591 = vmatpush1.bf16.msra.mxu0 %v512
        %592 = vmatprep.subr.bf16.mxu0 0
        %593 = vmatpush1.bf16.msra.mxu0 %v513
        %594 = vmatprep.mubr.bf16.mxu0 %v363
        %595 = vmatmul.mubr.bf16.gmra.mrb[0].mxu0 %v356
        %v596 = vpop.f32.mrb[0].mxu0
        %v597 = vadd.f32 0.0, %v596
        %v598 = vpop.f32.mrb[0].mxu0
        %v599 = vpop.f32.mrb[0].mxu0
        %v600 = vpop.f32.mrb[0].mxu0
        %601 = vdwg.mxu0
        %602 = vmatprep.subr.bf16.mxu0 0
        %603 = vmatpush1.bf16.msra.mxu0 %v514
        %604 = vmatprep.subr.bf16.mxu0 0
        %605 = vmatpush1.bf16.msra.mxu0 %v515
        %606 = vmatprep.subr.bf16.mxu0 0
        %607 = vmatpush1.bf16.msra.mxu0 %v516
        %608 = vmatprep.subr.bf16.mxu0 0
        %609 = vmatpush1.bf16.msra.mxu0 %v517
        %610 = vmatprep.subr.bf16.mxu0 0
        %611 = vmatpush1.bf16.msra.mxu0 %v518
        %612 = vmatprep.subr.bf16.mxu0 0
        %613 = vmatpush1.bf16.msra.mxu0 %v519
        %614 = vmatprep.subr.bf16.mxu0 0
        %615 = vmatpush1.bf16.msra.mxu0 %v520
        %616 = vmatprep.subr.bf16.mxu0 0
        %617 = vmatpush1.bf16.msra.mxu0 %v521
        %618 = vmatprep.subr.bf16.mxu0 0
        %619 = vmatpush1.bf16.msra.mxu0 %v522
        %620 = vmatprep.subr.bf16.mxu0 0
        %621 = vmatpush1.bf16.msra.mxu0 %v523
        %622 = vmatprep.subr.bf16.mxu0 0
        %623 = vmatpush1.bf16.msra.mxu0 %v524
        %624 = vmatprep.subr.bf16.mxu0 0
        %625 = vmatpush1.bf16.msra.mxu0 %v525
        %626 = vmatprep.subr.bf16.mxu0 0
        %627 = vmatpush1.bf16.msra.mxu0 %v526
        %628 = vmatprep.subr.bf16.mxu0 0
        %629 = vmatpush1.bf16.msra.mxu0 %v527
        %630 = vmatprep.subr.bf16.mxu0 0
        %631 = vmatpush1.bf16.msra.mxu0 %v528
        %632 = vmatprep.subr.bf16.mxu0 0
        %633 = vmatpush1.bf16.msra.mxu0 %v529
        %634 = vmatprep.mubr.bf16.mxu0 %v365
        %635 = vmatmul.mubr.bf16.gmra.mrb[0].mxu0 %v364
        %v636 = vpop.f32.mrb[0].mxu0
        %v637 = vadd.f32 %v597, %v636
        %v638 = vpop.f32.mrb[0].mxu0
        %v639 = vpop.f32.mrb[0].mxu0
        %v640 = vpop.f32.mrb[0].mxu0
        %641 = vdwg.mxu0
        %v642 = vadd.f32 %v259, %v637
        %643 = vst [vmem:[#allocation2] sm:$0xff] %v642
        %p644 = scmp.eq.s32.totalorder %s26, 5
        // Predicated region
        $region45: #{tpu_custom_call.1} parent=31 // pred_check
          %p645 = pneg %p644
        $region46: #{tpu_custom_call.1} parent=31 // pred_check_branch
          %647 = sbr.rel (%p645) target = $region48
        $region47: #{tpu_custom_call.1} parent=31 // pred_region
          %v648 = vld [vmem:[#allocation2] sm:$0xff]
          %v649 = vld [vmem:[%s2] sm:$0x1]
          %v651 = vlaneseq
          %v652 = vshrl.u32 %v651, 7
          %v653 = vsub.s32 0, %v652
          %v654 = vrot.slane %v649, %v653
          %v656 = vadd.f32 %v648, %v654
          %v657 = vlaneseq
          %v658 = vand.u32 %v657, 127
          %vm659 = vcmp.lt.s32.totalorder %v658, 30
          %v660 = vsel %vm659, %v656, -inf
          %661 = vmax.xlane.f32.xlu0 %v660
          %v662 = vpop.xlane.xlu0 %661
          %v663 = vsub.f32 %v656, %v662
          %v664 = vmul.f32 %v663, 1.442695
          %v665 = vpow.pop %v664
          %v666 = vsel %vm659, %v665, 0.0
          %667 = vadd.xlane.f32.xlu0 %v666
          %v668 = vpop.xlane.xlu0 %667
          %v669 = vlog2.pop %v668
          %v670 = vmul.f32 %v669, 0.6931472
          %v671 = vsub.f32 %v663, %v670
          %672 = vst [vmem:[#allocation8] sm:$0xff] %v671
        $region48: #{tpu_custom_call.1} parent=31 // pred_fallthru
          _
        // Predicated region
        $region49: #{tpu_custom_call.1} parent=31 // pred_check
          %p673 = pneg %p126
        $region50: #{tpu_custom_call.1} parent=31 // pred_check_branch
          %675 = sbr.rel (%p673) target = $region52
        $region51: #{tpu_custom_call.1} parent=31 // pred_region
          %s676 = smul.u32 4, %s25
          %s677 = ssub.s32 1, %s676
          %s678 = smul.u32 32, %s677
          %s680 = ssub.s32 128, %s678
          %681 = vsyncadd [#allocation5], %s680
          %p682 = scmp.ne.s32.totalorder 0, %s678
          %s683 = smul.addr %s676, 32
          %s684 = scalar_lea.hbm %s3, %s683
          %s685 = smul.u32 2, %s677
          %s686 = sshll.u32 [#allocation8], 4
          %s687 = int_to_ptr.vmem [resolvable:$true] %s686
          %s688 = sshll.u32 %s685, 4
          %692 = dma.vmem_to_hbm [thread:$0]  (%p682), %s687, %s688, %s684, [#allocation5], 32, 32, 2
        $region52: #{tpu_custom_call.1} parent=31 // pred_fallthru
          _
        // Predicated region
        $region53: #{tpu_custom_call.1} parent=31 // pred_check
          %p693 = pneg %p126
        $region54: #{tpu_custom_call.1} parent=31 // pred_check_branch
          %695 = sbr.rel (%p693) target = $region56
        $region55: #{tpu_custom_call.1} parent=31 // pred_region
          %696 = dma.done [#allocation5], 128
        $region56: #{tpu_custom_call.1} parent=31 // pred_fallthru
          _
      $region32: #{tpu_custom_call.1} parent=5 // pred_fallthru
        _
      %p697 = scmp.le.s32.totalorder 2, %s16
      // Predicated region
      $region57: #{tpu_custom_call.1} parent=5 // pred_check
        %p698 = pneg %p697
      $region58: #{tpu_custom_call.1} parent=5 // pred_check_branch
        %700 = sbr.rel (%p698) target = $region60
      $region59: #{tpu_custom_call.1} parent=5 // pred_region
        %s701 = ssub.s32 %s16, 2
      $region60: #{tpu_custom_call.1} parent=5 // pred_fallthru
        _
    $region6: #{tpu_custom_call.1} parent=1 // loop_footer
      %s20 = sadd.s32 1, %s16
    $region7: #{tpu_custom_call.1} parent=1 // loop_footer_branch
      %15 = sbr.rel target = $region3
    $region8: #{tpu_custom_call.1} parent=1 // loop_exit
      _
    %702 = vsyncpa [#allocation4], 1
    %s703 = scalar_lea.sflag [#allocation4], 1
    %704 = vsyncpa %s703, 1
    %705 = vsyncpa [#allocation7], 1
    %s706 = scalar_lea.sflag [#allocation7], 1
    %707 = vsyncpa %s706, 1
    %708 = vsyncpa [#allocation5], 1
    %s709 = scalar_lea.sflag [#allocation5], 1
    %710 = vsyncpa %s709, 1

</llo_original>
